<compile_context>
chip_gen: v5e
topology: v5e:2x2
jax: 0.10.0
libtpu: 0.0.40
codegen_flags: <defaults>
</compile_context>

<pallas_src>
import functools
import numpy as np
import jax
import jax.numpy as jnp
from jax.experimental import pallas as pl
from jax.experimental.pallas import tpu as pltpu

EPS = 1e-5


# ----------------------------------------------------------------------------
# Pallas kernel: one grid step == Nb batch elements in (Nb, C, T) layout.
# ----------------------------------------------------------------------------
def msconv_kernel(x_ref, w_fused_ref, b_fused_ref,
                  w_t1_ref, b_t1_ref, w_t2_ref, b_t2_ref,
                  mp_scale_ref, mp_shift_ref, o_ref, *,
                  dilations, compute_dtype):
    Nb, Cin, T = x_ref.shape
    Cout = o_ref.shape[1]
    BC = Cout // 4
    d0, d1 = dilations

    def shift(h, s):
        # out[:, t] = h[:, t - s], zero-filled at the sequence edge (Conv1d
        # 'same' zero padding).  Time sits on the lane axis, so this is a short
        # static lane shift; batch elements are processed independently, so no
        # cross-sequence wrap can occur.
        rows = h.shape[0]
        zeros = jnp.zeros((rows, abs(s)), h.dtype)
        if s > 0:
            return jnp.concatenate([zeros, h[:, :T - s]], axis=1)
        return jnp.concatenate([h[:, -s:], zeros], axis=1)

    def temporal(h, w_ref, b_ref, d):
        # k=3 dilated temporal conv (BN folded): the 3 taps are stacked along
        # the contraction dim (sublane concat, cheap for BC % 8 == 0) so each
        # branch is a single (BC, 3*BC) @ (3*BC, T) MXU matmul.
        rhs = jnp.concatenate([shift(h, d), h, shift(h, -d)], axis=0)
        return jnp.dot(w_ref[...], rhs.astype(w_ref.dtype),
                       preferred_element_type=jnp.float32) + b_ref[...]

    @pl.loop(0, Nb)
    def _(n):
        # in-kernel cast to the MXU operand dtype (x stays f32 in HBM)
        x = x_ref[n].astype(compute_dtype)                       # (Cin, T)

        # ONE wide MXU matmul: 4 pointwise branch convs + residual 1x1 conv,
        # BatchNorm folded in (bias added in f32).
        y = jnp.dot(w_fused_ref[...], x,
                    preferred_element_type=jnp.float32) + b_fused_ref[...]

        h1 = jnp.maximum(y[0 * BC:1 * BC], 0.0)   # branch 0 (dilation d0) + ReLU
        h2 = jnp.maximum(y[1 * BC:2 * BC], 0.0)   # branch 1 (dilation d1) + ReLU
        h3 = jnp.maximum(y[2 * BC:3 * BC], 0.0)   # branch 2 (maxpool)     + ReLU
        out4 = y[3 * BC:4 * BC]                   # branch 3 (1x1 only), no ReLU
        res = y[Cout:2 * Cout]                    # residual TemporalConv(k=1)

        out1 = temporal(h1, w_t1_ref, b_t1_ref, d0)
        out2 = temporal(h2, w_t2_ref, b_t2_ref, d1)

        # MaxPool1d(k=3, stride=1, pad=1) + BN (affine).  h3 is post-ReLU
        # (>= 0), so zero edge padding is equivalent to -inf padding.
        mp = jnp.maximum(jnp.maximum(shift(h3, 1), h3), shift(h3, -1))
        out3 = mp * mp_scale_ref[...] + mp_shift_ref[...]

        # concat(branches) along channels (sublanes) + residual + final ReLU,
        # one (Cout, T) store per element -- output already in (N, C, T).
        out = jnp.concatenate([out1, out2, out3, out4], axis=0) + res
        o_ref[n] = jnp.maximum(out, 0.0).astype(o_ref.dtype)


# ----------------------------------------------------------------------------
# BN folding helpers, generation-aware block / VMEM policy, wrapper
# ----------------------------------------------------------------------------
def fold_bn_into_conv(w, b, gamma, beta, mean, var):
    # w: (Cout, Cin, k), b: (Cout,); inference-mode BN folded into conv.
    s = gamma / jnp.sqrt(var + EPS)
    return w * s[:, None, None], (b - mean) * s + beta


def _vmem_capacity_bytes():
    try:
        info = pltpu.get_tpu_info()
        for attr in ("vmem_capacity_bytes", "vmem_size_bytes", "vmem_bytes"):
            val = getattr(info, attr, None)
            if val:
                return int(val)
    except Exception:
        pass
    return 64 << 20   # conservative: v7x per-TensorCore VMEM


def _pick_block_n(N, Cin, Cout, T, in_itemsize, w_itemsize):
    """Pick Nb (batch elements per grid step) and a vmem_limit.

    Keeps >= 4 grid steps when the batch allows (so each v7x TensorCore gets
    >= 2 pipelined steps, and single-TC chips still overlap DMA/compute) while
    bounding the double-buffered block footprint plus in-kernel temporaries.
    """
    vmem_cap = _vmem_capacity_bytes()
    BC = Cout // 4
    # pipeline-double-buffered weights/biases
    weight_bytes = (2 * (2 * Cout * Cin + 2 * 3 * BC * BC) * w_itemsize
                    + 2 * (2 * Cout + 4 * BC) * 4)
    # in-kernel f32 temporaries for ONE live batch element (y, branch slabs,
    # shifted copies, temporal rhs stacks, branch outputs), x2 slack
    temp_bytes = 2 * (14 * BC) * T * 4
    # double-buffered input + output blocks, per batch element
    per_elem = 2 * T * (Cin * in_itemsize + Cout * 4)

    budget = max(min(vmem_cap // 3, 16 << 20) - weight_bytes - temp_bytes, per_elem)
    min_steps = min(N, 4)
    nb_cap = max(1, N // min_steps)
    nb = int(max(1, min(nb_cap, budget // per_elem)))

    est_bytes = weight_bytes + temp_bytes + nb * per_elem
    vmem_limit = int(min(vmem_cap // 2, max(2 * est_bytes, 32 << 20)))
    return nb, vmem_limit


def ms_tcn_forward(x_nct, P, *, compute_dtype=jnp.float32, block_n=None):
    """x_nct: (N, Cin, T) float32 -> (N, Cout, T) float32 (inference-mode BN).

    No layout transposes and no wrapper-side activation casts: the kernel works
    directly on the PyTorch (N, C, T) layout.
    """
    N, Cin, T = x_nct.shape
    Cout = P["res_w"].shape[0]
    assert Cout % 4 == 0, "out_channels must be a multiple of 4 (branches)"
    BC = Cout // 4
    dilations = (1, 2)

    # Fold the four pointwise convs + residual conv with their BN and stack the
    # (folded) weights along output channels -> one (2*Cout, Cin) matmul LHS.
    # NOTE: folding BN into bf16-cast weights loses some precision (inference
    # only; validated with a looser tolerance below).
    w_rows, b_rows = [], []
    for i in range(4):
        wf, bf = fold_bn_into_conv(P["pw_w"][i], P["pw_b"][i], *P["bn1"][i])
        w_rows.append(wf[:, :, 0])          # (BC, Cin)
        b_rows.append(bf)
    wf, bf = fold_bn_into_conv(P["res_w"], P["res_b"], *P["bn_res"])
    w_rows.append(wf[:, :, 0])              # (Cout, Cin)
    b_rows.append(bf)
    w_fused = jnp.concatenate(w_rows, axis=0).astype(compute_dtype)   # (2*Cout, Cin)
    b_fused = jnp.concatenate(b_rows).reshape(2 * Cout, 1).astype(jnp.float32)

    # temporal convs (k=3): fold BN, stack the 3 taps along the contraction dim
    def fold_temporal(i):
        wf_, bf_ = fold_bn_into_conv(P["t_w"][i], P["t_b"][i], *P["bn2"][i])
        w_taps = jnp.concatenate([wf_[:, :, j] for j in range(3)], axis=1)  # (BC, 3*BC)
        return w_taps.astype(compute_dtype), bf_.reshape(BC, 1).astype(jnp.float32)

    w_t1, b_t1 = fold_temporal(0)
    w_t2, b_t2 = fold_temporal(1)

    # BN after MaxPool -> affine scale/shift (column vectors, broadcast over T)
    g, b, m, v = P["bn_mp"]
    s = g / jnp.sqrt(v + EPS)
    mp_scale = s.reshape(BC, 1).astype(jnp.float32)
    mp_shift = (b - m * s).reshape(BC, 1).astype(jnp.float32)

    in_isz = jnp.dtype(x_nct.dtype).itemsize
    w_isz = jnp.dtype(compute_dtype).itemsize
    nb, vmem_limit = _pick_block_n(N, Cin, Cout, T, in_isz, w_isz)
    if block_n is not None:
        nb = int(block_n)
    grid = (pl.cdiv(N, nb),)   # partial last block handled by Pallas padding

    kernel = functools.partial(msconv_kernel, dilations=dilations,
                               compute_dtype=compute_dtype)

    out = pl.pallas_call(
        kernel,
        out_shape=jax.ShapeDtypeStruct((N, Cout, T), jnp.float32),
        grid=grid,
        in_specs=[
            pl.BlockSpec((nb, Cin, T), lambda n: (n, 0, 0)),
            pl.BlockSpec((2 * Cout, Cin), lambda n: (0, 0)),
            pl.BlockSpec((2 * Cout, 1), lambda n: (0, 0)),
            pl.BlockSpec((BC, 3 * BC), lambda n: (0, 0)),
            pl.BlockSpec((BC, 1), lambda n: (0, 0)),
            pl.BlockSpec((BC, 3 * BC), lambda n: (0, 0)),
            pl.BlockSpec((BC, 1), lambda n: (0, 0)),
            pl.BlockSpec((BC, 1), lambda n: (0, 0)),
            pl.BlockSpec((BC, 1), lambda n: (0, 0)),
        ],
        out_specs=pl.BlockSpec((nb, Cout, T), lambda n: (n, 0, 0)),
        compiler_params=pltpu.CompilerParams(
            dimension_semantics=("parallel",),
            vmem_limit_bytes=vmem_limit),
    )(x_nct, w_fused, b_fused, w_t1, b_t1, w_t2, b_t2, mp_scale, mp_shift)

    return out   # already (N, Cout, T)


# ----------------------------------------------------------------------------
# Pure-JAX reference (un-folded eval-mode BN) to validate the kernel
# ----------------------------------------------------------------------------
def reference_forward(x_nct, P):
    hi = jax.lax.Precision.HIGHEST
    x = jnp.transpose(x_nct, (0, 2, 1))   # (N, T, Cin)

    def bn(h, p):
        g, b, m, v = p
        return (h - m) * (g / jnp.sqrt(v + EPS)) + b

    def conv1x1(h, w, b):                 # w: (Co, Ci, 1)
        return jnp.einsum("ntc,oc->nto", h, w[:, :, 0], precision=hi) + b

    def convk(h, w, b, d):                # w: (Co, Ci, k)
        k = w.shape[2]
        pad = (k + (k - 1) * (d - 1) - 1) // 2
        Tn = h.shape[1]
        hp = jnp.pad(h, ((0, 0), (pad, pad), (0, 0)))
        out = b[None, None, :]
        for j in range(k):
            out = out + jnp.einsum("ntc,oc->nto", hp[:, j * d:j * d + Tn, :],
                                   w[:, :, j], precision=hi)
        return out

    outs = []
    for i, d in enumerate([1, 2]):
        h = jax.nn.relu(bn(conv1x1(x, P["pw_w"][i], P["pw_b"][i]), P["bn1"][i]))
        outs.append(bn(convk(h, P["t_w"][i], P["t_b"][i], d), P["bn2"][i]))

    h = jax.nn.relu(bn(conv1x1(x, P["pw_w"][2], P["pw_b"][2]), P["bn1"][2]))
    Tn = h.shape[1]
    hp = jnp.pad(h, ((0, 0), (1, 1), (0, 0)), constant_values=-jnp.inf)
    mp = jnp.maximum(jnp.maximum(hp[:, 0:Tn], hp[:, 1:Tn + 1]), hp[:, 2:Tn + 2])
    outs.append(bn(mp, P["bn_mp"]))

    outs.append(bn(conv1x1(x, P["pw_w"][3], P["pw_b"][3]), P["bn1"][3]))

    res = bn(conv1x1(x, P["res_w"], P["res_b"]), P["bn_res"])
    out = jax.nn.relu(jnp.concatenate(outs, axis=-1) + res)
    return jnp.transpose(out, (0, 2, 1))


# ----------------------------------------------------------------------------
# Deterministic parameter construction + demo
# ----------------------------------------------------------------------------
def make_params(key, Cin, Cout):
    BC = Cout // 4
    keys = iter(jax.random.split(key, 64))
    nxt = lambda: next(keys)
    nrm = lambda shape, s=0.1: s * jax.random.normal(nxt(), shape, jnp.float32)

    def make_bn(c):
        return (1.0 + 0.1 * jax.random.normal(nxt(), (c,), jnp.float32),   # gamma
                0.1 * jax.random.normal(nxt(), (c,), jnp.float32),         # beta
                0.1 * jax.random.normal(nxt(), (c,), jnp.float32),         # running_mean
                1.0 + 0.1 * jax.random.uniform(nxt(), (c,), jnp.float32))  # running_var

    return {
        "pw_w": [nrm((BC, Cin, 1)) for _ in range(4)],
        "pw_b": [nrm((BC,)) for _ in range(4)],
        "bn1":  [make_bn(BC) for _ in range(4)],
        "t_w":  [nrm((BC, BC, 3)) for _ in range(2)],
        "t_b":  [nrm((BC,)) for _ in range(2)],
        "bn2":  [make_bn(BC) for _ in range(2)],
        "bn_mp": make_bn(BC),
        "res_w": nrm((Cout, Cin, 1)),
        "res_b": nrm((Cout,)),
        "bn_res": make_bn(Cout),
    }


if __name__ == "__main__":
    # small but representative: Cout % 4 == 0, branch channels BC = 8 (sublane
    # aligned), input in PyTorch (N, C, T) layout
    N, Cin, Cout, T = 4, 16, 32, 24

    key = jax.random.PRNGKey(0)
    kx, kx2, kp = jax.random.split(key, 3)
    x = jax.random.normal(kx, (N, Cin, T), jnp.float32)
    P = make_params(kp, Cin, Cout)

    ref = jax.block_until_ready(reference_forward(x, P))

    # f32 MXU operands: tight check
    out_f32 = jax.block_until_ready(ms_tcn_forward(x, P, compute_dtype=jnp.float32))
    assert out_f32.shape == (N, Cout, T)
    np.testing.assert_allclose(np.asarray(out_f32), np.asarray(ref),
                               rtol=2e-3, atol=2e-3)

    # bf16 MXU operands (v6e/v7x fast path), f32 accumulation: looser check
    out_bf16 = jax.block_until_ready(ms_tcn_forward(x, P, compute_dtype=jnp.bfloat16))
    np.testing.assert_allclose(np.asarray(out_bf16), np.asarray(ref),
                               rtol=3e-2, atol=3e-2)

    # multi-element blocks + partial last block: N=6, Nb=4 -> grid = cdiv(6,4)=2
    N2 = 6
    x2 = jax.random.normal(kx2, (N2, Cin, T), jnp.float32)
    ref2 = jax.block_until_ready(reference_forward(x2, P))
    out2 = jax.block_until_ready(
        ms_tcn_forward(x2, P, compute_dtype=jnp.float32, block_n=4))
    np.testing.assert_allclose(np.asarray(out2), np.asarray(ref2),
                               rtol=2e-3, atol=2e-3)

    print("KERNEL_OK")
</pallas_src>

<mosaic_0001>
module attributes {stable_mosaic.version = 11 : i64} {
  func.func @msconv_kernel(%arg0: i32, %arg1: memref<1x16x24xf32, #tpu.memory_space<vmem>>, %arg2: memref<64x16xf32, #tpu.memory_space<vmem>>, %arg3: memref<64x1xf32, #tpu.memory_space<vmem>>, %arg4: memref<8x24xf32, #tpu.memory_space<vmem>>, %arg5: memref<8x1xf32, #tpu.memory_space<vmem>>, %arg6: memref<8x24xf32, #tpu.memory_space<vmem>>, %arg7: memref<8x1xf32, #tpu.memory_space<vmem>>, %arg8: memref<8x1xf32, #tpu.memory_space<vmem>>, %arg9: memref<8x1xf32, #tpu.memory_space<vmem>>, %arg10: memref<1x32x24xf32, #tpu.memory_space<vmem>>) attributes {dimension_semantics = [#tpu.dimension_semantics<parallel>], iteration_bounds = array<i64: 4>, scalar_prefetch = 0 : i64, scratch_operands = 0 : i64, tpu.core_type = #tpu.core_type<tc>, window_params = [{transform_indices = @transform_0, window_bounds = array<i64: 1, 16, 24>}, {pipeline_mode = #tpu.pipeline_mode<synchronous>, transform_indices = @transform_1, window_bounds = array<i64: 64, 16>}, {pipeline_mode = #tpu.pipeline_mode<synchronous>, transform_indices = @transform_2, window_bounds = array<i64: 64, 1>}, {pipeline_mode = #tpu.pipeline_mode<synchronous>, transform_indices = @transform_3, window_bounds = array<i64: 8, 24>}, {pipeline_mode = #tpu.pipeline_mode<synchronous>, transform_indices = @transform_4, window_bounds = array<i64: 8, 1>}, {pipeline_mode = #tpu.pipeline_mode<synchronous>, transform_indices = @transform_5, window_bounds = array<i64: 8, 24>}, {pipeline_mode = #tpu.pipeline_mode<synchronous>, transform_indices = @transform_6, window_bounds = array<i64: 8, 1>}, {pipeline_mode = #tpu.pipeline_mode<synchronous>, transform_indices = @transform_7, window_bounds = array<i64: 8, 1>}, {pipeline_mode = #tpu.pipeline_mode<synchronous>, transform_indices = @transform_8, window_bounds = array<i64: 8, 1>}, {transform_indices = @transform_9, window_bounds = array<i64: 1, 32, 24>}]} {
    %c0_i32 = arith.constant 0 : i32
    %c1_i32 = arith.constant 1 : i32
    %0 = arith.muli %c0_i32, %c1_i32 : i32
    %c0_i32_0 = arith.constant 0 : i32
    %1 = arith.addi %c0_i32_0, %0 : i32
    %2 = arith.index_cast %1 : i32 to index
    %c0 = arith.constant 0 : index
    %c0_1 = arith.constant 0 : index
    %3 = vector.load %arg1[%2, %c0, %c0_1] : memref<1x16x24xf32, #tpu.memory_space<vmem>>, vector<1x16x24xf32>
    %4 = vector.shape_cast %3 : vector<1x16x24xf32> to vector<16x24xf32>
    %c0_2 = arith.constant 0 : index
    %c0_3 = arith.constant 0 : index
    %5 = vector.load %arg2[%c0_2, %c0_3] : memref<64x16xf32, #tpu.memory_space<vmem>>, vector<64x16xf32>
    %cst = arith.constant dense<0.000000e+00> : vector<64x24xf32>
    %6 = tpu.matmul %5, %4, %cst {dimension_numbers = #tpu.dot_dimension_numbers<[1], [0], [0], [1], [0, 0, 1, 1], [], []>} : vector<64x16xf32>, vector<16x24xf32>, vector<64x24xf32> -> vector<64x24xf32>
    %c0_4 = arith.constant 0 : index
    %c0_5 = arith.constant 0 : index
    %7 = vector.load %arg3[%c0_4, %c0_5] : memref<64x1xf32, #tpu.memory_space<vmem>>, vector<64x1xf32>
    %8 = vector.broadcast %7 : vector<64x1xf32> to vector<64x24xf32>
    %9 = arith.addf %6, %8 : vector<64x24xf32>
    %10 = vector.extract_strided_slice %9 {offsets = [0, 0], sizes = [8, 24], strides = [1, 1]} : vector<64x24xf32> to vector<8x24xf32>
    %cst_6 = arith.constant 0.000000e+00 : f32
    %11 = vector.broadcast %cst_6 : f32 to vector<8x24xf32>
    %12 = arith.maximumf %10, %11 : vector<8x24xf32>
    %13 = vector.extract_strided_slice %9 {offsets = [8, 0], sizes = [8, 24], strides = [1, 1]} : vector<64x24xf32> to vector<8x24xf32>
    %cst_7 = arith.constant 0.000000e+00 : f32
    %14 = vector.broadcast %cst_7 : f32 to vector<8x24xf32>
    %15 = arith.maximumf %13, %14 : vector<8x24xf32>
    %16 = vector.extract_strided_slice %9 {offsets = [16, 0], sizes = [8, 24], strides = [1, 1]} : vector<64x24xf32> to vector<8x24xf32>
    %cst_8 = arith.constant 0.000000e+00 : f32
    %17 = vector.broadcast %cst_8 : f32 to vector<8x24xf32>
    %18 = arith.maximumf %16, %17 : vector<8x24xf32>
    %19 = vector.extract_strided_slice %9 {offsets = [24, 0], sizes = [8, 24], strides = [1, 1]} : vector<64x24xf32> to vector<8x24xf32>
    %20 = vector.extract_strided_slice %9 {offsets = [32, 0], sizes = [32, 24], strides = [1, 1]} : vector<64x24xf32> to vector<32x24xf32>
    %cst_9 = arith.constant 0.000000e+00 : f32
    %21 = vector.broadcast %cst_9 : f32 to vector<8x1xf32>
    %22 = vector.extract_strided_slice %12 {offsets = [0, 0], sizes = [8, 23], strides = [1, 1]} : vector<8x24xf32> to vector<8x23xf32>
    %23 = tpu.concatenate %21, %22 in 1 : vector<8x1xf32>, vector<8x23xf32> -> vector<8x24xf32>
    %cst_10 = arith.constant 0.000000e+00 : f32
    %24 = vector.broadcast %cst_10 : f32 to vector<8x1xf32>
    %25 = vector.extract_strided_slice %12 {offsets = [0, 1], sizes = [8, 23], strides = [1, 1]} : vector<8x24xf32> to vector<8x23xf32>
    %26 = tpu.concatenate %25, %24 in 1 : vector<8x23xf32>, vector<8x1xf32> -> vector<8x24xf32>
    %27 = tpu.concatenate %23, %12, %26 in 0 : vector<8x24xf32>, vector<8x24xf32>, vector<8x24xf32> -> vector<24x24xf32>
    %c0_11 = arith.constant 0 : index
    %c0_12 = arith.constant 0 : index
    %28 = vector.load %arg4[%c0_11, %c0_12] : memref<8x24xf32, #tpu.memory_space<vmem>>, vector<8x24xf32>
    %cst_13 = arith.constant dense<0.000000e+00> : vector<8x24xf32>
    %29 = tpu.matmul %28, %27, %cst_13 {dimension_numbers = #tpu.dot_dimension_numbers<[1], [0], [0], [1], [0, 0, 1, 1], [], []>} : vector<8x24xf32>, vector<24x24xf32>, vector<8x24xf32> -> vector<8x24xf32>
    %c0_14 = arith.constant 0 : index
    %c0_15 = arith.constant 0 : index
    %30 = vector.load %arg5[%c0_14, %c0_15] : memref<8x1xf32, #tpu.memory_space<vmem>>, vector<8x1xf32>
    %31 = vector.broadcast %30 : vector<8x1xf32> to vector<8x24xf32>
    %32 = arith.addf %29, %31 : vector<8x24xf32>
    %cst_16 = arith.constant 0.000000e+00 : f32
    %33 = vector.broadcast %cst_16 : f32 to vector<8x2xf32>
    %34 = vector.extract_strided_slice %15 {offsets = [0, 0], sizes = [8, 22], strides = [1, 1]} : vector<8x24xf32> to vector<8x22xf32>
    %35 = tpu.concatenate %33, %34 in 1 : vector<8x2xf32>, vector<8x22xf32> -> vector<8x24xf32>
    %cst_17 = arith.constant 0.000000e+00 : f32
    %36 = vector.broadcast %cst_17 : f32 to vector<8x2xf32>
    %37 = vector.extract_strided_slice %15 {offsets = [0, 2], sizes = [8, 22], strides = [1, 1]} : vector<8x24xf32> to vector<8x22xf32>
    %38 = tpu.concatenate %37, %36 in 1 : vector<8x22xf32>, vector<8x2xf32> -> vector<8x24xf32>
    %39 = tpu.concatenate %35, %15, %38 in 0 : vector<8x24xf32>, vector<8x24xf32>, vector<8x24xf32> -> vector<24x24xf32>
    %c0_18 = arith.constant 0 : index
    %c0_19 = arith.constant 0 : index
    %40 = vector.load %arg6[%c0_18, %c0_19] : memref<8x24xf32, #tpu.memory_space<vmem>>, vector<8x24xf32>
    %cst_20 = arith.constant dense<0.000000e+00> : vector<8x24xf32>
    %41 = tpu.matmul %40, %39, %cst_20 {dimension_numbers = #tpu.dot_dimension_numbers<[1], [0], [0], [1], [0, 0, 1, 1], [], []>} : vector<8x24xf32>, vector<24x24xf32>, vector<8x24xf32> -> vector<8x24xf32>
    %c0_21 = arith.constant 0 : index
    %c0_22 = arith.constant 0 : index
    %42 = vector.load %arg7[%c0_21, %c0_22] : memref<8x1xf32, #tpu.memory_space<vmem>>, vector<8x1xf32>
    %43 = vector.broadcast %42 : vector<8x1xf32> to vector<8x24xf32>
    %44 = arith.addf %41, %43 : vector<8x24xf32>
    %cst_23 = arith.constant 0.000000e+00 : f32
    %45 = vector.broadcast %cst_23 : f32 to vector<8x1xf32>
    %46 = vector.extract_strided_slice %18 {offsets = [0, 0], sizes = [8, 23], strides = [1, 1]} : vector<8x24xf32> to vector<8x23xf32>
    %47 = tpu.concatenate %45, %46 in 1 : vector<8x1xf32>, vector<8x23xf32> -> vector<8x24xf32>
    %48 = arith.maximumf %47, %18 : vector<8x24xf32>
    %cst_24 = arith.constant 0.000000e+00 : f32
    %49 = vector.broadcast %cst_24 : f32 to vector<8x1xf32>
    %50 = vector.extract_strided_slice %18 {offsets = [0, 1], sizes = [8, 23], strides = [1, 1]} : vector<8x24xf32> to vector<8x23xf32>
    %51 = tpu.concatenate %50, %49 in 1 : vector<8x23xf32>, vector<8x1xf32> -> vector<8x24xf32>
    %52 = arith.maximumf %48, %51 : vector<8x24xf32>
    %c0_25 = arith.constant 0 : index
    %c0_26 = arith.constant 0 : index
    %53 = vector.load %arg8[%c0_25, %c0_26] : memref<8x1xf32, #tpu.memory_space<vmem>>, vector<8x1xf32>
    %54 = vector.broadcast %53 : vector<8x1xf32> to vector<8x24xf32>
    %55 = arith.mulf %52, %54 : vector<8x24xf32>
    %c0_27 = arith.constant 0 : index
    %c0_28 = arith.constant 0 : index
    %56 = vector.load %arg9[%c0_27, %c0_28] : memref<8x1xf32, #tpu.memory_space<vmem>>, vector<8x1xf32>
    %57 = vector.broadcast %56 : vector<8x1xf32> to vector<8x24xf32>
    %58 = arith.addf %55, %57 : vector<8x24xf32>
    %59 = tpu.concatenate %32, %44, %58, %19 in 0 : vector<8x24xf32>, vector<8x24xf32>, vector<8x24xf32>, vector<8x24xf32> -> vector<32x24xf32>
    %60 = arith.addf %59, %20 : vector<32x24xf32>
    %cst_29 = arith.constant 0.000000e+00 : f32
    %61 = vector.broadcast %cst_29 : f32 to vector<32x24xf32>
    %62 = arith.maximumf %60, %61 : vector<32x24xf32>
    %63 = arith.index_cast %1 : i32 to index
    %c0_30 = arith.constant 0 : index
    %c0_31 = arith.constant 0 : index
    %64 = vector.load %arg10[%63, %c0_30, %c0_31] : memref<1x32x24xf32, #tpu.memory_space<vmem>>, vector<1x32x24xf32>
    %65 = vector.shape_cast %64 : vector<1x32x24xf32> to vector<32x24xf32>
    %66 = vector.shape_cast %62 : vector<32x24xf32> to vector<1x32x24xf32>
    tpu.vector_store %arg10[%63, %c0_30, %c0_31], %66 {strides = array<i32>} : memref<1x32x24xf32, #tpu.memory_space<vmem>>, vector<1x32x24xf32>,
    %c1_i32_32 = arith.constant 1 : i32
    return
  }
  func.func @transform_0(%arg0: i32) -> (i32, i32, i32) {
    %c0_i32 = arith.constant 0 : i32
    %c0_i32_0 = arith.constant 0 : i32
    %c0_i32_1 = arith.constant 0 : i32
    return %arg0, %c0_i32, %c0_i32_0 : i32, i32, i32
  }
  func.func @transform_1(%arg0: i32) -> (i32, i32) {
    %c0_i32 = arith.constant 0 : i32
    %c0_i32_0 = arith.constant 0 : i32
    %c0_i32_1 = arith.constant 0 : i32
    return %c0_i32, %c0_i32_0 : i32, i32
  }
  func.func @transform_2(%arg0: i32) -> (i32, i32) {
    %c0_i32 = arith.constant 0 : i32
    %c0_i32_0 = arith.constant 0 : i32
    %c0_i32_1 = arith.constant 0 : i32
    return %c0_i32, %c0_i32_0 : i32, i32
  }
  func.func @transform_3(%arg0: i32) -> (i32, i32) {
    %c0_i32 = arith.constant 0 : i32
    %c0_i32_0 = arith.constant 0 : i32
    %c0_i32_1 = arith.constant 0 : i32
    return %c0_i32, %c0_i32_0 : i32, i32
  }
  func.func @transform_4(%arg0: i32) -> (i32, i32) {
    %c0_i32 = arith.constant 0 : i32
    %c0_i32_0 = arith.constant 0 : i32
    %c0_i32_1 = arith.constant 0 : i32
    return %c0_i32, %c0_i32_0 : i32, i32
  }
  func.func @transform_5(%arg0: i32) -> (i32, i32) {
    %c0_i32 = arith.constant 0 : i32
    %c0_i32_0 = arith.constant 0 : i32
    %c0_i32_1 = arith.constant 0 : i32
    return %c0_i32, %c0_i32_0 : i32, i32
  }
  func.func @transform_6(%arg0: i32) -> (i32, i32) {
    %c0_i32 = arith.constant 0 : i32
    %c0_i32_0 = arith.constant 0 : i32
    %c0_i32_1 = arith.constant 0 : i32
    return %c0_i32, %c0_i32_0 : i32, i32
  }
  func.func @transform_7(%arg0: i32) -> (i32, i32) {
    %c0_i32 = arith.constant 0 : i32
    %c0_i32_0 = arith.constant 0 : i32
    %c0_i32_1 = arith.constant 0 : i32
    return %c0_i32, %c0_i32_0 : i32, i32
  }
  func.func @transform_8(%arg0: i32) -> (i32, i32) {
    %c0_i32 = arith.constant 0 : i32
    %c0_i32_0 = arith.constant 0 : i32
    %c0_i32_1 = arith.constant 0 : i32
    return %c0_i32, %c0_i32_0 : i32, i32
  }
  func.func @transform_9(%arg0: i32) -> (i32, i32, i32) {
    %c0_i32 = arith.constant 0 : i32
    %c0_i32_0 = arith.constant 0 : i32
    %c0_i32_1 = arith.constant 0 : i32
    return %arg0, %c0_i32, %c0_i32_0 : i32, i32, i32
  }
}

</mosaic_0001>

<llo_original>
// kernel: tpu_custom_call.1
$region0: #{tpu_custom_call.1}
  #allocation0 [shape = 'u32[]', space=smem, size = 0x4, offset = 0x4, fixed_abs, tag = 'smem constant byte address 0x4 - core index']
  #allocation1 [shape = 'u32[72,128]{1,0:T(1,128)}', space=vmem, size = 0x9000, scoped, tag = 'internal scratch']
  %s0 = inlined_call_operand.vmem [shape: f32[4,16,24], index: 0, kind: input, shape index: {}]
  %s1 = inlined_call_operand.vmem [shape: f32[64,16], index: 1, kind: input, shape index: {}]
  %s2 = inlined_call_operand.vmem [shape: f32[64,1], index: 2, kind: input, shape index: {}]
  %s3 = inlined_call_operand.vmem [shape: f32[8,24], index: 3, kind: input, shape index: {}]
  %s4 = inlined_call_operand.vmem [shape: f32[8,1], index: 4, kind: input, shape index: {}]
  %s5 = inlined_call_operand.vmem [shape: f32[8,24], index: 5, kind: input, shape index: {}]
  %s6 = inlined_call_operand.vmem [shape: f32[8,1], index: 6, kind: input, shape index: {}]
  %s7 = inlined_call_operand.vmem [shape: f32[8,1], index: 7, kind: input, shape index: {}]
  %s8 = inlined_call_operand.vmem [shape: f32[8,1], index: 8, kind: input, shape index: {}]
  %s9 = inlined_call_operand.vmem [shape: f32[4,32,24], index: 9, kind: output, shape index: {}]
  %s10 = sld [smem:[#allocation0]]
  $region69: #{tpu_custom_call.1} parent=0
    _
  %s12 = ssub.s32 1, %s10
  %s13 = scalar_select 0, %s12, %s10
  loop: start=0, step=1, limit=6
  $region2: #{tpu_custom_call.1} parent=0 // loop_pre_header
    _
  $region3: #{tpu_custom_call.1} parent=0 // loop_header
    %s15 = sphi 0, %s19
    %p16 = scmp.ge.s32.totalorder %s15, 6
    %s25 = sphi 0, %s27
    %s28 = sphi 0, %s25
    %s29 = sphi 0, %s28
    %s45 = sphi 0, %s29
    %s49 = sphi 0, %s49
    %s51 = sphi 0, %s49
    %s52 = sphi 0, %s51
    %s66 = sphi 0, %s52
    %s70 = sphi 0, %s70
    %s72 = sphi 0, %s70
    %s73 = sphi 0, %s72
    %s87 = sphi 0, %s73
    %s91 = sphi 0, %s91
    %s93 = sphi 0, %s91
    %s94 = sphi 0, %s93
    %s108 = sphi 0, %s94
    %s112 = sphi 0, %s112
    %s114 = sphi 0, %s112
    %s115 = sphi 0, %s114
    %s129 = sphi 0, %s115
    %s133 = sphi 0, %s133
    %s135 = sphi 0, %s133
    %s136 = sphi 0, %s135
    %s150 = sphi 0, %s136
    %s154 = sphi 0, %s154
    %s156 = sphi 0, %s154
    %s157 = sphi 0, %s156
    %s171 = sphi 0, %s157
    %s175 = sphi 0, %s175
    %s177 = sphi 0, %s175
    %s178 = sphi 0, %s177
    %s192 = sphi 0, %s178
    %s196 = sphi 0, %s196
    %s198 = sphi 0, %s196
    %s199 = sphi 0, %s198
    %s213 = sphi 0, %s199
    %s219 = sphi 0, %s221
    %s222 = sphi 0, %s219
    %s223 = sphi 0, %s222
    %s239 = sphi 0, %s223
  $region4: #{tpu_custom_call.1} parent=0 // loop_header_branch
    %18 = sbr.rel (%p16) target = $region8
  $region5: #{tpu_custom_call.1} parent=0 // loop_body
    %s20 = ssub.s32 %s15, 1
    %s21 = ssub.s32 %s15, 2
    %s22 = sadd.s32 %s15, 1
    %s23 = ssub.s32 %s15, %s22
    %p24 = scmp.eq.s32.totalorder %s23, 0
    %s26 = sadd.s32 %s25, 1
    %s27 = scalar_select %p24, %s25, %s26
    %p30 = pneg %p24
    %p31 = scmp.eq.s32.totalorder %s15, 3
    %p32 = por %p30, %p31
    %p33 = scmp.ne.s32.totalorder %s25, %s28
    %p34 = scmp.eq.s32.totalorder %s15, 0
    %p35 = por %p33, %p34
    %p36 = scmp.ne.s32.totalorder %s25, %s28
    %p37 = scmp.eq.s32.totalorder %s20, 3
    %p38 = por %p36, %p37
    %p39 = scmp.ne.s32.totalorder %s28, %s29
    %p40 = scmp.eq.s32.totalorder %s20, 0
    %p41 = por %p39, %p40
    %p42 = scmp.ne.s32.totalorder %s28, %s29
    %p43 = scmp.eq.s32.totalorder %s21, 3
    %p44 = por %p42, %p43
    %p46 = scmp.ne.s32.totalorder %s29, %s45
    %p47 = scmp.eq.s32.totalorder %s21, 0
    %p48 = por %p46, %p47
    %s50 = sadd.s32 %s49, 1
    %p53 = scmp.eq.s32.totalorder %s15, 3
    %p54 = scmp.ne.s32.totalorder %s49, %s51
    %p55 = scmp.eq.s32.totalorder %s15, 0
    %p56 = por %p54, %p55
    %p57 = scmp.ne.s32.totalorder %s49, %s51
    %p58 = scmp.eq.s32.totalorder %s20, 3
    %p59 = por %p57, %p58
    %p60 = scmp.ne.s32.totalorder %s51, %s52
    %p61 = scmp.eq.s32.totalorder %s20, 0
    %p62 = por %p60, %p61
    %p63 = scmp.ne.s32.totalorder %s51, %s52
    %p64 = scmp.eq.s32.totalorder %s21, 3
    %p65 = por %p63, %p64
    %p67 = scmp.ne.s32.totalorder %s52, %s66
    %p68 = scmp.eq.s32.totalorder %s21, 0
    %p69 = por %p67, %p68
    %s71 = sadd.s32 %s70, 1
    %p74 = scmp.eq.s32.totalorder %s15, 3
    %p75 = scmp.ne.s32.totalorder %s70, %s72
    %p76 = scmp.eq.s32.totalorder %s15, 0
    %p77 = por %p75, %p76
    %p78 = scmp.ne.s32.totalorder %s70, %s72
    %p79 = scmp.eq.s32.totalorder %s20, 3
    %p80 = por %p78, %p79
    %p81 = scmp.ne.s32.totalorder %s72, %s73
    %p82 = scmp.eq.s32.totalorder %s20, 0
    %p83 = por %p81, %p82
    %p84 = scmp.ne.s32.totalorder %s72, %s73
    %p85 = scmp.eq.s32.totalorder %s21, 3
    %p86 = por %p84, %p85
    %p88 = scmp.ne.s32.totalorder %s73, %s87
    %p89 = scmp.eq.s32.totalorder %s21, 0
    %p90 = por %p88, %p89
    %s92 = sadd.s32 %s91, 1
    %p95 = scmp.eq.s32.totalorder %s15, 3
    %p96 = scmp.ne.s32.totalorder %s91, %s93
    %p97 = scmp.eq.s32.totalorder %s15, 0
    %p98 = por %p96, %p97
    %p99 = scmp.ne.s32.totalorder %s91, %s93
    %p100 = scmp.eq.s32.totalorder %s20, 3
    %p101 = por %p99, %p100
    %p102 = scmp.ne.s32.totalorder %s93, %s94
    %p103 = scmp.eq.s32.totalorder %s20, 0
    %p104 = por %p102, %p103
    %p105 = scmp.ne.s32.totalorder %s93, %s94
    %p106 = scmp.eq.s32.totalorder %s21, 3
    %p107 = por %p105, %p106
    %p109 = scmp.ne.s32.totalorder %s94, %s108
    %p110 = scmp.eq.s32.totalorder %s21, 0
    %p111 = por %p109, %p110
    %s113 = sadd.s32 %s112, 1
    %p116 = scmp.eq.s32.totalorder %s15, 3
    %p117 = scmp.ne.s32.totalorder %s112, %s114
    %p118 = scmp.eq.s32.totalorder %s15, 0
    %p119 = por %p117, %p118
    %p120 = scmp.ne.s32.totalorder %s112, %s114
    %p121 = scmp.eq.s32.totalorder %s20, 3
    %p122 = por %p120, %p121
    %p123 = scmp.ne.s32.totalorder %s114, %s115
    %p124 = scmp.eq.s32.totalorder %s20, 0
    %p125 = por %p123, %p124
    %p126 = scmp.ne.s32.totalorder %s114, %s115
    %p127 = scmp.eq.s32.totalorder %s21, 3
    %p128 = por %p126, %p127
    %p130 = scmp.ne.s32.totalorder %s115, %s129
    %p131 = scmp.eq.s32.totalorder %s21, 0
    %p132 = por %p130, %p131
    %s134 = sadd.s32 %s133, 1
    %p137 = scmp.eq.s32.totalorder %s15, 3
    %p138 = scmp.ne.s32.totalorder %s133, %s135
    %p139 = scmp.eq.s32.totalorder %s15, 0
    %p140 = por %p138, %p139
    %p141 = scmp.ne.s32.totalorder %s133, %s135
    %p142 = scmp.eq.s32.totalorder %s20, 3
    %p143 = por %p141, %p142
    %p144 = scmp.ne.s32.totalorder %s135, %s136
    %p145 = scmp.eq.s32.totalorder %s20, 0
    %p146 = por %p144, %p145
    %p147 = scmp.ne.s32.totalorder %s135, %s136
    %p148 = scmp.eq.s32.totalorder %s21, 3
    %p149 = por %p147, %p148
    %p151 = scmp.ne.s32.totalorder %s136, %s150
    %p152 = scmp.eq.s32.totalorder %s21, 0
    %p153 = por %p151, %p152
    %s155 = sadd.s32 %s154, 1
    %p158 = scmp.eq.s32.totalorder %s15, 3
    %p159 = scmp.ne.s32.totalorder %s154, %s156
    %p160 = scmp.eq.s32.totalorder %s15, 0
    %p161 = por %p159, %p160
    %p162 = scmp.ne.s32.totalorder %s154, %s156
    %p163 = scmp.eq.s32.totalorder %s20, 3
    %p164 = por %p162, %p163
    %p165 = scmp.ne.s32.totalorder %s156, %s157
    %p166 = scmp.eq.s32.totalorder %s20, 0
    %p167 = por %p165, %p166
    %p168 = scmp.ne.s32.totalorder %s156, %s157
    %p169 = scmp.eq.s32.totalorder %s21, 3
    %p170 = por %p168, %p169
    %p172 = scmp.ne.s32.totalorder %s157, %s171
    %p173 = scmp.eq.s32.totalorder %s21, 0
    %p174 = por %p172, %p173
    %s176 = sadd.s32 %s175, 1
    %p179 = scmp.eq.s32.totalorder %s15, 3
    %p180 = scmp.ne.s32.totalorder %s175, %s177
    %p181 = scmp.eq.s32.totalorder %s15, 0
    %p182 = por %p180, %p181
    %p183 = scmp.ne.s32.totalorder %s175, %s177
    %p184 = scmp.eq.s32.totalorder %s20, 3
    %p185 = por %p183, %p184
    %p186 = scmp.ne.s32.totalorder %s177, %s178
    %p187 = scmp.eq.s32.totalorder %s20, 0
    %p188 = por %p186, %p187
    %p189 = scmp.ne.s32.totalorder %s177, %s178
    %p190 = scmp.eq.s32.totalorder %s21, 3
    %p191 = por %p189, %p190
    %p193 = scmp.ne.s32.totalorder %s178, %s192
    %p194 = scmp.eq.s32.totalorder %s21, 0
    %p195 = por %p193, %p194
    %s197 = sadd.s32 %s196, 1
    %p200 = scmp.eq.s32.totalorder %s15, 3
    %p201 = scmp.ne.s32.totalorder %s196, %s198
    %p202 = scmp.eq.s32.totalorder %s15, 0
    %p203 = por %p201, %p202
    %p204 = scmp.ne.s32.totalorder %s196, %s198
    %p205 = scmp.eq.s32.totalorder %s20, 3
    %p206 = por %p204, %p205
    %p207 = scmp.ne.s32.totalorder %s198, %s199
    %p208 = scmp.eq.s32.totalorder %s20, 0
    %p209 = por %p207, %p208
    %p210 = scmp.ne.s32.totalorder %s198, %s199
    %p211 = scmp.eq.s32.totalorder %s21, 3
    %p212 = por %p210, %p211
    %p214 = scmp.ne.s32.totalorder %s199, %s213
    %p215 = scmp.eq.s32.totalorder %s21, 0
    %p216 = por %p214, %p215
    %s217 = ssub.s32 %s15, %s22
    %p218 = scmp.eq.s32.totalorder %s217, 0
    %s220 = sadd.s32 %s219, 1
    %s221 = scalar_select %p218, %s219, %s220
    %p224 = pneg %p218
    %p225 = scmp.eq.s32.totalorder %s15, 3
    %p226 = por %p224, %p225
    %p227 = scmp.ne.s32.totalorder %s219, %s222
    %p228 = scmp.eq.s32.totalorder %s15, 0
    %p229 = por %p227, %p228
    %p230 = scmp.ne.s32.totalorder %s219, %s222
    %p231 = scmp.eq.s32.totalorder %s20, 3
    %p232 = por %p230, %p231
    %p233 = scmp.ne.s32.totalorder %s222, %s223
    %p234 = scmp.eq.s32.totalorder %s20, 0
    %p235 = por %p233, %p234
    %p236 = scmp.ne.s32.totalorder %s222, %s223
    %p237 = scmp.eq.s32.totalorder %s21, 3
    %p238 = por %p236, %p237
    %p240 = scmp.ne.s32.totalorder %s223, %s239
    %p241 = scmp.eq.s32.totalorder %s21, 0
    %p242 = por %p240, %p241
    %p243 = scmp.le.s32.totalorder 1, %s15
    %p244 = scmp.lt.s32.totalorder %s15, 5
    %p245 = pnand %p243, %p244
    %p246 = pneg %p245
    // Predicated region
    $region9: #{tpu_custom_call.1} parent=5 // pred_check
      _
    $region10: #{tpu_custom_call.1} parent=5 // pred_check_branch
      %248 = sbr.rel (%p245) target = $region12
    $region11: #{tpu_custom_call.1} parent=5 // pred_region
      %s249 = ssub.s32 %s15, 1
      // Predicated region
      $region13: #{tpu_custom_call.1} parent=11 // pred_check
        %p250 = pneg %p62
      $region14: #{tpu_custom_call.1} parent=11 // pred_check_branch
        %252 = sbr.rel (%p250) target = $region16
      $region15: #{tpu_custom_call.1} parent=11 // pred_region
        _
      $region16: #{tpu_custom_call.1} parent=11 // pred_fallthru
        _
      // Predicated region
      $region17: #{tpu_custom_call.1} parent=11 // pred_check
        %p253 = pneg %p83
      $region18: #{tpu_custom_call.1} parent=11 // pred_check_branch
        %255 = sbr.rel (%p253) target = $region20
      $region19: #{tpu_custom_call.1} parent=11 // pred_region
        _
      $region20: #{tpu_custom_call.1} parent=11 // pred_fallthru
        _
      // Predicated region
      $region21: #{tpu_custom_call.1} parent=11 // pred_check
        %p256 = pneg %p104
      $region22: #{tpu_custom_call.1} parent=11 // pred_check_branch
        %258 = sbr.rel (%p256) target = $region24
      $region23: #{tpu_custom_call.1} parent=11 // pred_region
        _
      $region24: #{tpu_custom_call.1} parent=11 // pred_fallthru
        _
      // Predicated region
      $region25: #{tpu_custom_call.1} parent=11 // pred_check
        %p259 = pneg %p125
      $region26: #{tpu_custom_call.1} parent=11 // pred_check_branch
        %261 = sbr.rel (%p259) target = $region28
      $region27: #{tpu_custom_call.1} parent=11 // pred_region
        _
      $region28: #{tpu_custom_call.1} parent=11 // pred_fallthru
        _
      // Predicated region
      $region29: #{tpu_custom_call.1} parent=11 // pred_check
        %p262 = pneg %p146
      $region30: #{tpu_custom_call.1} parent=11 // pred_check_branch
        %264 = sbr.rel (%p262) target = $region32
      $region31: #{tpu_custom_call.1} parent=11 // pred_region
        _
      $region32: #{tpu_custom_call.1} parent=11 // pred_fallthru
        _
      // Predicated region
      $region33: #{tpu_custom_call.1} parent=11 // pred_check
        %p265 = pneg %p167
      $region34: #{tpu_custom_call.1} parent=11 // pred_check_branch
        %267 = sbr.rel (%p265) target = $region36
      $region35: #{tpu_custom_call.1} parent=11 // pred_region
        _
      $region36: #{tpu_custom_call.1} parent=11 // pred_fallthru
        _
      // Predicated region
      $region37: #{tpu_custom_call.1} parent=11 // pred_check
        %p268 = pneg %p188
      $region38: #{tpu_custom_call.1} parent=11 // pred_check_branch
        %270 = sbr.rel (%p268) target = $region40
      $region39: #{tpu_custom_call.1} parent=11 // pred_region
        _
      $region40: #{tpu_custom_call.1} parent=11 // pred_fallthru
        _
      // Predicated region
      $region41: #{tpu_custom_call.1} parent=11 // pred_check
        %p271 = pneg %p209
      $region42: #{tpu_custom_call.1} parent=11 // pred_check_branch
        %273 = sbr.rel (%p271) target = $region44
      $region43: #{tpu_custom_call.1} parent=11 // pred_region
        _
      $region44: #{tpu_custom_call.1} parent=11 // pred_fallthru
        _
    $region12: #{tpu_custom_call.1} parent=5 // pred_fallthru
      _
    %p274 = scmp.lt.s32.totalorder %s15, 4
    // Predicated region
    $region45: #{tpu_custom_call.1} parent=5 // pred_check
      %p275 = pneg %p274
    $region46: #{tpu_custom_call.1} parent=5 // pred_check_branch
      %277 = sbr.rel (%p275) target = $region48
    $region47: #{tpu_custom_call.1} parent=5 // pred_region
      // Predicated region
      $region49: #{tpu_custom_call.1} parent=47 // pred_check
        %p278 = pneg %p35
      $region50: #{tpu_custom_call.1} parent=47 // pred_check_branch
        %280 = sbr.rel (%p278) target = $region52
      $region51: #{tpu_custom_call.1} parent=47 // pred_region
        %p281 = scmp.lt.s32.totalorder %s15, 3
        %s282 = scalar_select %p281, %s15, 3
        %s283 = smul.addr %s282, 2
        %s284 = smul.addr %s283, 8
        %s285 = scalar_lea.vmem %s0, %s284
      $region52: #{tpu_custom_call.1} parent=47 // pred_fallthru
        _
    $region48: #{tpu_custom_call.1} parent=5 // pred_fallthru
      _
    %p286 = scmp.le.s32.totalorder 1, %s15
    %p287 = scmp.lt.s32.totalorder %s15, 5
    %p288 = pnand %p286, %p287
    %p289 = pneg %p288
    // Predicated region
    $region53: #{tpu_custom_call.1} parent=5 // pred_check
      _
    $region54: #{tpu_custom_call.1} parent=5 // pred_check_branch
      %291 = sbr.rel (%p288) target = $region56
    $region55: #{tpu_custom_call.1} parent=5 // pred_region
      %s292 = ssub.s32 %s15, 1
      %p293 = scmp.lt.s32.totalorder %s20, 3
      %s294 = scalar_select %p293, %s20, 3
      %s295 = smul.addr %s294, 2
      %s296 = smul.addr %s295, 8
      %s297 = scalar_lea.vmem %s0, %s296
      %p298 = pneg %p41
      %p299 = pneg %p38
      %p300 = pneg %p62
      %p301 = pneg %p59
      %p302 = pneg %p83
      %p303 = pneg %p80
      %p304 = pneg %p104
      %p305 = pneg %p101
      %p306 = pneg %p125
      %p307 = pneg %p122
      %p308 = pneg %p146
      %p309 = pneg %p143
      %p310 = pneg %p167
      %p311 = pneg %p164
      %p312 = pneg %p188
      %p313 = pneg %p185
      %p314 = pneg %p209
      %p315 = pneg %p206
      %p316 = pneg %p235
      %p317 = pneg %p232
      %p318 = scmp.lt.s32.totalorder %s20, 3
      %s319 = scalar_select %p318, %s20, 3
      %s320 = smul.addr %s319, 4
      %s321 = smul.addr %s320, 8
      %s322 = scalar_lea.vmem %s9, %s321
      %p323 = scmp.lt.s32.totalorder %s20, 3
      %s324 = scalar_select %p323, %s20, 3
      %s325 = smul.addr %s324, 2
      %s326 = smul.addr %s325, 8
      %s327 = scalar_lea.vmem %s0, %s326
      %p328 = scmp.lt.s32.totalorder %s20, 3
      %s329 = scalar_select %p328, %s20, 3
      %s330 = smul.addr %s329, 4
      %s331 = smul.addr %s330, 8
      %s332 = scalar_lea.vmem %s9, %s331
      %v333 = vld [vmem:[%s327] sm:$0xff]
      %v334 = vld [vmem:[%s327 + $0x8] sm:$0xff]
      %v335 = vld [vmem:[%s1] sm:$0xff]
      %v336 = vld [vmem:[%s1 + $0x8] sm:$0xff]
      %v337 = vld [vmem:[%s1 + $0x10] sm:$0xff]
      %v338 = vld [vmem:[%s1 + $0x18] sm:$0xff]
      %v339 = vld [vmem:[%s1 + $0x20] sm:$0xff]
      %v340 = vld [vmem:[%s1 + $0x28] sm:$0xff]
      %v341 = vld [vmem:[%s1 + $0x30] sm:$0xff]
      %v342 = vld [vmem:[%s1 + $0x38] sm:$0xff]
      %v343 = vld [vmem:[%s2] sm:$0xff]
      %v344 = vld [vmem:[%s2 + $0x8] sm:$0xff]
      %v345 = vld [vmem:[%s2 + $0x10] sm:$0xff]
      %v346 = vld [vmem:[%s2 + $0x18] sm:$0xff]
      %v347 = vld [vmem:[%s2 + $0x20] sm:$0xff]
      %v348 = vld [vmem:[%s2 + $0x28] sm:$0xff]
      %v349 = vld [vmem:[%s2 + $0x30] sm:$0xff]
      %v350 = vld [vmem:[%s2 + $0x38] sm:$0xff]
      %352 = vset.pattern.permute.xlu0 0
      %353 = vperm.xlu0 %352, %v343
      %v354 = vpop.permute.xlu0 %353
      %357 = vset.pattern.permute.xlu0 0
      %358 = vperm.xlu0 %357, %v344
      %v359 = vpop.permute.xlu0 %358
      %362 = vset.pattern.permute.xlu0 0
      %363 = vperm.xlu0 %362, %v345
      %v364 = vpop.permute.xlu0 %363
      %367 = vset.pattern.permute.xlu0 0
      %368 = vperm.xlu0 %367, %v346
      %v369 = vpop.permute.xlu0 %368
      %372 = vset.pattern.permute.xlu0 0
      %373 = vperm.xlu0 %372, %v347
      %v374 = vpop.permute.xlu0 %373
      %377 = vset.pattern.permute.xlu0 0
      %378 = vperm.xlu0 %377, %v348
      %v379 = vpop.permute.xlu0 %378
      %382 = vset.pattern.permute.xlu0 0
      %383 = vperm.xlu0 %382, %v349
      %v384 = vpop.permute.xlu0 %383
      %387 = vset.pattern.permute.xlu0 0
      %388 = vperm.xlu0 %387, %v350
      %v389 = vpop.permute.xlu0 %388
      %vm391 = vcmask 130048
      %v393 = vsel %vm391, %v335, 0
      %v396 = vsel %vm391, %v336, 0
      %v399 = vsel %vm391, %v337, 0
      %v402 = vsel %vm391, %v338, 0
      %v405 = vsel %vm391, %v339, 0
      %v408 = vsel %vm391, %v340, 0
      %v411 = vsel %vm391, %v341, 0
      %v414 = vsel %vm391, %v342, 0
      %416 = vmatpush.msra.mxu0 0.0
      %417 = vmatpush.msra.mxu0 0.0
      %418 = vmatpush.msra.mxu0 0.0
      %419 = vmatpush.msra.mxu0 0.0
      %420 = vmatpush.msra.mxu0 0.0
      %421 = vmatpush.msra.mxu0 0.0
      %422 = vmatpush.msra.mxu0 0.0
      %423 = vmatpush.msra.mxu0 0.0
      %424 = vmatpush.msra.mxu0 0.0
      %425 = vmatpush.msra.mxu0 0.0
      %426 = vmatpush.msra.mxu0 0.0
      %427 = vmatpush.msra.mxu0 0.0
      %428 = vmatpush.msra.mxu0 0.0
      %429 = vmatpush.msra.mxu0 0.0
      %430 = vmatpush.msra.mxu0 %v334
      %431 = vmatpush.msra.mxu0 %v333
      %432 = vmatmul.f32.gmra.mxu0 %v393
      %v433 = vpop.f32.mrf.mxu0
      %v434 = vadd.f32 %v354, %v433
      %435 = vmatmul.f32.gmra.mxu0 %v396
      %v436 = vpop.f32.mrf.mxu0
      %v437 = vadd.f32 %v359, %v436
      %438 = vmatmul.f32.gmra.mxu0 %v399
      %v439 = vpop.f32.mrf.mxu0
      %v440 = vadd.f32 %v364, %v439
      %441 = vmatmul.f32.gmra.mxu0 %v402
      %v442 = vpop.f32.mrf.mxu0
      %v443 = vadd.f32 %v369, %v442
      %444 = vmatmul.f32.gmra.mxu0 %v405
      %v445 = vpop.f32.mrf.mxu0
      %v446 = vadd.f32 %v374, %v445
      %447 = vmatmul.f32.gmra.mxu0 %v408
      %v448 = vpop.f32.mrf.mxu0
      %v449 = vadd.f32 %v379, %v448
      %450 = vmatmul.f32.gmra.mxu0 %v411
      %v451 = vpop.f32.mrf.mxu0
      %v452 = vadd.f32 %v384, %v451
      %453 = vmatmul.f32.gmra.mxu0 %v414
      %v454 = vpop.f32.mrf.mxu0
      %v455 = vadd.f32 %v389, %v454
      %456 = vdwg.mxu0
      %v457 = vmax.f32 %v434, 0.0
      %v458 = vmax.f32 %v437, 0.0
      %v459 = vmax.f32 %v440, 0.0
      %461 = vrot.lane.b32.xlu0 %v457, 1
      %v462 = vpop.permute.xlu0 %461
      %vm464 = vcmask 7168
      %v465 = vsel %vm464, 0.0, %v462
      %466 = vrot.lane.b32.xlu0 %v457, 127
      %v467 = vpop.permute.xlu0 %466
      %vm469 = vcmask 187392
      %v470 = vsel %vm469, %v467, 0.0
      %v471 = vld [vmem:[%s3] sm:$0xff]
      %v472 = vld [vmem:[%s4] sm:$0xff]
      %474 = vset.pattern.permute.xlu0 0
      %475 = vperm.xlu0 %474, %v472
      %v476 = vpop.permute.xlu0 %475
      %vm478 = vcmask 195584
      %v480 = vsel %vm478, %v471, 0
      %482 = vmatpush.msra.mxu0 0.0
      %483 = vmatpush.msra.mxu0 0.0
      %484 = vmatpush.msra.mxu0 0.0
      %485 = vmatpush.msra.mxu0 0.0
      %486 = vmatpush.msra.mxu0 0.0
      %487 = vmatpush.msra.mxu0 0.0
      %488 = vmatpush.msra.mxu0 0.0
      %489 = vmatpush.msra.mxu0 0.0
      %490 = vmatpush.msra.mxu0 0.0
      %491 = vmatpush.msra.mxu0 0.0
      %492 = vmatpush.msra.mxu0 0.0
      %493 = vmatpush.msra.mxu0 0.0
      %494 = vmatpush.msra.mxu0 0.0
      %495 = vmatpush.msra.mxu0 %v470
      %496 = vmatpush.msra.mxu0 %v457
      %497 = vmatpush.msra.mxu0 %v465
      %498 = vmatmul.f32.gmra.mxu0 %v480
      %v499 = vpop.f32.mrf.mxu0
      %v500 = vadd.f32 %v476, %v499
      %501 = vdwg.mxu0
      %503 = vrot.lane.b32.xlu0 %v458, 2
      %v504 = vpop.permute.xlu0 %503
      %vm506 = vcmask 15360
      %v507 = vsel %vm506, 0.0, %v504
      %508 = vrot.lane.b32.xlu0 %v458, 126
      %v509 = vpop.permute.xlu0 %508
      %vm511 = vcmask 179200
      %v512 = vsel %vm511, %v509, 0.0
      %v513 = vld [vmem:[%s5] sm:$0xff]
      %v514 = vld [vmem:[%s6] sm:$0xff]
      %516 = vset.pattern.permute.xlu0 0
      %517 = vperm.xlu0 %516, %v514
      %v518 = vpop.permute.xlu0 %517
      %v521 = vsel %vm478, %v513, 0
      %523 = vmatpush.msra.mxu0 0.0
      %524 = vmatpush.msra.mxu0 0.0
      %525 = vmatpush.msra.mxu0 0.0
      %526 = vmatpush.msra.mxu0 0.0
      %527 = vmatpush.msra.mxu0 0.0
      %528 = vmatpush.msra.mxu0 0.0
      %529 = vmatpush.msra.mxu0 0.0
      %530 = vmatpush.msra.mxu0 0.0
      %531 = vmatpush.msra.mxu0 0.0
      %532 = vmatpush.msra.mxu0 0.0
      %533 = vmatpush.msra.mxu0 0.0
      %534 = vmatpush.msra.mxu0 0.0
      %535 = vmatpush.msra.mxu0 0.0
      %536 = vmatpush.msra.mxu0 %v512
      %537 = vmatpush.msra.mxu0 %v458
      %538 = vmatpush.msra.mxu0 %v507
      %539 = vmatmul.f32.gmra.mxu0 %v521
      %v540 = vpop.f32.mrf.mxu0
      %v541 = vadd.f32 %v518, %v540
      %542 = vdwg.mxu0
      %544 = vrot.lane.b32.xlu0 %v459, 1
      %v545 = vpop.permute.xlu0 %544
      %v547 = vsel %vm464, 0.0, %v545
      %v548 = vmax.f32 %v547, %v459
      %549 = vrot.lane.b32.xlu0 %v459, 127
      %v550 = vpop.permute.xlu0 %549
      %v552 = vsel %vm469, %v550, 0.0
      %v553 = vmax.f32 %v548, %v552
      %v554 = vld [vmem:[%s7] sm:$0xff]
      %556 = vset.pattern.permute.xlu0 0
      %557 = vperm.xlu0 %556, %v554
      %v558 = vpop.permute.xlu0 %557
      %v560 = vmul.f32 %v553, %v558
      %v561 = vld [vmem:[%s8] sm:$0xff]
      %563 = vset.pattern.permute.xlu0 0
      %564 = vperm.xlu0 %563, %v561
      %v565 = vpop.permute.xlu0 %564
      %v567 = vadd.f32 %v560, %v565
      %v568 = vadd.f32 %v500, %v446
      %v569 = vadd.f32 %v541, %v449
      %v570 = vadd.f32 %v567, %v452
      %v571 = vadd.f32 %v443, %v455
      %v572 = vmax.f32 %v568, 0.0
      %v573 = vmax.f32 %v569, 0.0
      %v574 = vmax.f32 %v570, 0.0
      %v575 = vmax.f32 %v571, 0.0
      %576 = vst.msk [vmem:[%s332] sm:$0xff] %vm478, %v572
      %577 = vst.msk [vmem:[%s332 + $0x8] sm:$0xff] %vm478, %v573
      %578 = vst.msk [vmem:[%s332 + $0x10] sm:$0xff] %vm478, %v574
      %579 = vst.msk [vmem:[%s332 + $0x18] sm:$0xff] %vm478, %v575
      %p580 = scmp.lt.s32.totalorder %s20, 3
      %s581 = scalar_select %p580, %s20, 3
      %s582 = smul.addr %s581, 4
      %s583 = smul.addr %s582, 8
      %s584 = scalar_lea.vmem %s9, %s583
      // Predicated region
      $region57: #{tpu_custom_call.1} parent=55 // pred_check
        %p585 = pneg %p232
      $region58: #{tpu_custom_call.1} parent=55 // pred_check_branch
        %587 = sbr.rel (%p585) target = $region60
      $region59: #{tpu_custom_call.1} parent=55 // pred_region
        _
      $region60: #{tpu_custom_call.1} parent=55 // pred_fallthru
        _
    $region56: #{tpu_custom_call.1} parent=5 // pred_fallthru
      _
    %p588 = scmp.le.s32.totalorder 2, %s15
    // Predicated region
    $region61: #{tpu_custom_call.1} parent=5 // pred_check
      %p589 = pneg %p588
    $region62: #{tpu_custom_call.1} parent=5 // pred_check_branch
      %591 = sbr.rel (%p589) target = $region64
    $region63: #{tpu_custom_call.1} parent=5 // pred_region
      %s592 = ssub.s32 %s15, 2
      // Predicated region
      $region65: #{tpu_custom_call.1} parent=63 // pred_check
        %p593 = pneg %p238
      $region66: #{tpu_custom_call.1} parent=63 // pred_check_branch
        %595 = sbr.rel (%p593) target = $region68
      $region67: #{tpu_custom_call.1} parent=63 // pred_region
        %p596 = scmp.lt.s32.totalorder %s21, 3
        %s597 = scalar_select %p596, %s21, 3
        %s598 = smul.addr %s597, 4
        %s599 = smul.addr %s598, 8
        %s600 = scalar_lea.vmem %s9, %s599
      $region68: #{tpu_custom_call.1} parent=63 // pred_fallthru
        _
    $region64: #{tpu_custom_call.1} parent=5 // pred_fallthru
      _
  $region6: #{tpu_custom_call.1} parent=0 // loop_footer
    %s19 = sadd.s32 1, %s15
  $region7: #{tpu_custom_call.1} parent=0 // loop_footer_branch
    %14 = sbr.rel target = $region3
  $region8: #{tpu_custom_call.1} parent=0 // loop_exit
    _

</llo_original>
